<compile_context>
chip_gen: v6e
topology: v6e:2x2x1
jax: 0.10.0
libtpu: 0.0.40
codegen_flags: <defaults>
</compile_context>

<pallas_src>
import jax
import jax.numpy as jnp
import numpy as np
from jax.experimental import pallas as pl
from jax.experimental.pallas import tpu as pltpu

H = 256          # hidden width (fc1 / fc2 / fc2_switch / fc3)
SH = 128         # switch-branch hidden width (fc3_switch_value / fc3_switch_adv)
N_SWITCH = 2
OUT_LANES = 128  # lane-dense packed output width


def critic_switch_kernel(x_ref, a_ref, w1_ref, w2b_ref, w2cs_ref, w33_ref,
                         wh_ref, b_ref, out_ref):
    """Single-block fused forward pass.

    Packed output layout (lane-dense [B, 128]):
      col 0    : critic_out
      cols 1-2 : switch_out (dueling combination folded into the head weights)
      col 3    : switch_out_value
      cols 4+  : exact zeros (zero head weights + zero bias)
    """
    b = b_ref[...]                                           # [4, 512] packed biases

    # fc1: h = relu(x @ W1 + b1)
    h = jnp.maximum(
        jnp.dot(x_ref[...], w1_ref[...], preferred_element_type=jnp.float32)
        + b[0:1, 0:H], 0.0)                                  # [B, 256]

    # action contribution of fc2 (1/max_action already folded into w2b)
    a_part = jnp.dot(a_ref[...], w2b_ref[...],
                     preferred_element_type=jnp.float32)     # [B, 256]

    # fused fc2 || fc2_switch on the shared input h
    l2 = jnp.dot(h, w2cs_ref[...],
                 preferred_element_type=jnp.float32) + b[1:2, :]   # [B, 512]
    c = jnp.maximum(l2[:, 0:H] + a_part, 0.0)                # critic branch [B, 256]
    s = jnp.maximum(l2[:, H:2 * H], 0.0)                     # switch branch [B, 256]

    # fc3 (critic) and fused fc3_switch_value || fc3_switch_adv (shared input s)
    c3 = jnp.maximum(
        jnp.dot(c, w33_ref[:, 0:H], preferred_element_type=jnp.float32)
        + b[2:3, 0:H], 0.0)                                  # [B, 256]
    sva = jnp.maximum(
        jnp.dot(s, w33_ref[:, H:2 * H], preferred_element_type=jnp.float32)
        + b[2:3, H:2 * H], 0.0)                              # [B, 256] = [sv || sa]

    # fused heads -> one lane-dense [B, 128] store (no masked partial stores)
    out = (jnp.dot(c3, wh_ref[0:H, :], preferred_element_type=jnp.float32)
           + jnp.dot(sva, wh_ref[H:2 * H, :], preferred_element_type=jnp.float32)
           + b[3:4, 0:OUT_LANES])
    out_ref[...] = out


def pack_params(p, max_action):
    """One-time parameter packing / fusion (outside the hot path)."""
    f32 = np.float32
    inv = f32(1.0 / max_action)

    w1 = np.asarray(p["w1"], f32)                            # [obs+goal, 256]
    w2b = np.asarray(p["w2b"], f32) * inv                    # [action, 256] (scaled)
    w2cs = np.concatenate([np.asarray(p["w2a"], f32),
                           np.asarray(p["w2s"], f32)], axis=1)       # [256, 512]
    w33 = np.concatenate([np.asarray(p["w3"], f32),
                          np.asarray(p["w3v"], f32),
                          np.asarray(p["w3a"], f32)], axis=1)        # [256, 512]

    # Fused head weight [512, 128]; the dueling combination
    #   switch_j = val + adv_j - 0.5*(adv_0 + adv_1)
    # is linear in (val, adv_0, adv_1), so it folds exactly into the weights.
    wq = np.asarray(p["wq"], f32)        # [256, 1]
    wvs = np.asarray(p["wvs"], f32)      # [128, 1]
    was = np.asarray(p["was"], f32)      # [128, 2]
    wh = np.zeros((H + 2 * SH, OUT_LANES), f32)
    wh[0:H, 0] = wq[:, 0]                                    # critic_out
    wh[H:H + SH, 1] = wvs[:, 0]                              # val -> switch_0
    wh[H:H + SH, 2] = wvs[:, 0]                              # val -> switch_1
    wh[H:H + SH, 3] = wvs[:, 0]                              # switch_value
    d = 0.5 * (was[:, 0] - was[:, 1])
    wh[H + SH:H + 2 * SH, 1] = d                             # +0.5*adv0 - 0.5*adv1
    wh[H + SH:H + 2 * SH, 2] = -d                            # -0.5*adv0 + 0.5*adv1

    # All biases packed into one [4, 512] array.
    b_all = np.zeros((4, 2 * H), f32)
    b_all[0, 0:H] = np.asarray(p["b1"], f32)[0]
    b_all[1, 0:H] = np.asarray(p["b2"], f32)[0]
    b_all[1, H:2 * H] = np.asarray(p["b2s"], f32)[0]
    b_all[2, 0:H] = np.asarray(p["b3"], f32)[0]
    b_all[2, H:H + SH] = np.asarray(p["b3v"], f32)[0]
    b_all[2, H + SH:2 * H] = np.asarray(p["b3a"], f32)[0]
    bq = np.asarray(p["bq"], f32)[0, 0]
    bvs = np.asarray(p["bvs"], f32)[0, 0]
    bas = np.asarray(p["bas"], f32)[0]
    bd = 0.5 * (bas[0] - bas[1])
    b_all[3, 0] = bq
    b_all[3, 1] = bvs + bd
    b_all[3, 2] = bvs - bd
    b_all[3, 3] = bvs

    packed = dict(w1=w1, w2b=w2b, w2cs=w2cs, w33=w33, wh=wh, b_all=b_all)
    return {k: jnp.asarray(v) for k, v in packed.items()}


def critic_with_switch_forward(x, actions, packed):
    """x: [B, obs+goal], actions: [B, action] -> (critic_out, switch_out, switch_value)."""
    B = x.shape[0]
    vmem = pl.BlockSpec(memory_space=pltpu.MemorySpace.VMEM)
    inputs = (x, actions, packed["w1"], packed["w2b"], packed["w2cs"],
              packed["w33"], packed["wh"], packed["b_all"])

    out = pl.pallas_call(
        critic_switch_kernel,
        out_shape=jax.ShapeDtypeStruct((B, OUT_LANES), jnp.float32),
        in_specs=[vmem] * len(inputs),
        out_specs=vmem,
    )(*inputs)

    critic_out = out[:, 0:1]
    switch_out = out[:, 1:1 + N_SWITCH]
    switch_value = out[:, 1 + N_SWITCH:2 + N_SWITCH]
    return critic_out, switch_out, switch_value


def init_params(key, obs, goal, action, hidden=H, switch_hidden=SH, n_switch=N_SWITCH):
    """Deterministic synthetic init; weights stored as [in, out]."""
    def dense(k, fan_in, fan_out, scale=0.05):
        kw, kb = jax.random.split(k)
        w = scale * jax.random.normal(kw, (fan_in, fan_out), jnp.float32)
        b = scale * jax.random.normal(kb, (1, fan_out), jnp.float32)
        return w, b

    keys = jax.random.split(key, 9)
    p = {}
    p["w1"], p["b1"] = dense(keys[0], obs + goal, hidden)
    # fc2 takes cat([h_x, actions/max]) — split its weight into two pieces.
    w2_full, p["b2"] = dense(keys[1], hidden + action, hidden)
    p["w2a"] = w2_full[:hidden, :]
    p["w2b"] = w2_full[hidden:, :]
    p["w3"], p["b3"] = dense(keys[2], hidden, hidden)
    p["wq"], p["bq"] = dense(keys[3], hidden, 1)
    p["w2s"], p["b2s"] = dense(keys[4], hidden, hidden)
    p["w3v"], p["b3v"] = dense(keys[5], hidden, switch_hidden)
    p["w3a"], p["b3a"] = dense(keys[6], hidden, switch_hidden)
    p["wvs"], p["bvs"] = dense(keys[7], switch_hidden, 1)
    p["was"], p["bas"] = dense(keys[8], switch_hidden, n_switch)
    return p


def reference_forward(x, actions, p, max_action):
    """Pure-JAX reference following the PyTorch module exactly."""
    hp = jax.lax.Precision.HIGHEST
    dot = lambda a, b: jnp.dot(a, b, precision=hp)
    relu = lambda v: jnp.maximum(v, 0.0)
    h = relu(dot(x, p["w1"]) + p["b1"])
    cat = jnp.concatenate([h, actions / max_action], axis=1)
    w2_full = jnp.concatenate([p["w2a"], p["w2b"]], axis=0)
    c = relu(dot(cat, w2_full) + p["b2"])
    c = relu(dot(c, p["w3"]) + p["b3"])
    critic_out = dot(c, p["wq"]) + p["bq"]
    s = relu(dot(h, p["w2s"]) + p["b2s"])
    sv = relu(dot(s, p["w3v"]) + p["b3v"])
    sa = relu(dot(s, p["w3a"]) + p["b3a"])
    val = dot(sv, p["wvs"]) + p["bvs"]
    adv = dot(sa, p["was"]) + p["bas"]
    switch_out = val + (adv - jnp.mean(adv, axis=1, keepdims=True))
    return critic_out, switch_out, val


if __name__ == "__main__":
    # env_params: obs=10, goal=3, action=4, action_max=2.0 ; batch=8
    obs, goal, action = 10, 3, 4
    max_action = 2.0
    B = 8

    key = jax.random.PRNGKey(0)
    k_param, k_x, k_a = jax.random.split(key, 3)

    params = init_params(k_param, obs, goal, action)
    packed = pack_params(params, max_action)

    x = jax.random.normal(k_x, (B, obs + goal), jnp.float32)
    actions = max_action * jax.random.uniform(k_a, (B, action), jnp.float32, -1.0, 1.0)

    critic_out, switch_out, switch_val = critic_with_switch_forward(x, actions, packed)
    jax.block_until_ready((critic_out, switch_out, switch_val))

    # Verify against a pure-JAX reference of the original module's math.
    ref_c, ref_s, ref_v = reference_forward(x, actions, params, max_action)
    assert critic_out.shape == (B, 1)
    assert switch_out.shape == (B, N_SWITCH)
    assert switch_val.shape == (B, 1)
    np.testing.assert_allclose(np.asarray(critic_out), np.asarray(ref_c), rtol=1e-4, atol=1e-5)
    np.testing.assert_allclose(np.asarray(switch_out), np.asarray(ref_s), rtol=1e-4, atol=1e-5)
    np.testing.assert_allclose(np.asarray(switch_val), np.asarray(ref_v), rtol=1e-4, atol=1e-5)

    print("KERNEL_OK")
</pallas_src>

<mosaic_0001>
module attributes {stable_mosaic.version = 11 : i64} {
  func.func @critic_switch_kernel(%arg0: memref<8x13xf32, #tpu.memory_space<vmem>>, %arg1: memref<8x4xf32, #tpu.memory_space<vmem>>, %arg2: memref<13x256xf32, #tpu.memory_space<vmem>>, %arg3: memref<4x256xf32, #tpu.memory_space<vmem>>, %arg4: memref<256x512xf32, #tpu.memory_space<vmem>>, %arg5: memref<256x512xf32, #tpu.memory_space<vmem>>, %arg6: memref<512x128xf32, #tpu.memory_space<vmem>>, %arg7: memref<4x512xf32, #tpu.memory_space<vmem>>, %arg8: memref<8x128xf32, #tpu.memory_space<vmem>>) attributes {dimension_semantics = [], scalar_prefetch = 0 : i64, scratch_operands = 0 : i64, tpu.core_type = #tpu.core_type<tc>} {
    %c0 = arith.constant 0 : index
    %c0_0 = arith.constant 0 : index
    %0 = vector.load %arg7[%c0, %c0_0] : memref<4x512xf32, #tpu.memory_space<vmem>>, vector<4x512xf32>
    %c0_1 = arith.constant 0 : index
    %c0_2 = arith.constant 0 : index
    %1 = vector.load %arg0[%c0_1, %c0_2] : memref<8x13xf32, #tpu.memory_space<vmem>>, vector<8x13xf32>
    %c0_3 = arith.constant 0 : index
    %c0_4 = arith.constant 0 : index
    %2 = vector.load %arg2[%c0_3, %c0_4] : memref<13x256xf32, #tpu.memory_space<vmem>>, vector<13x256xf32>
    %cst = arith.constant dense<0.000000e+00> : vector<8x256xf32>
    %3 = tpu.matmul %1, %2, %cst {dimension_numbers = #tpu.dot_dimension_numbers<[1], [0], [0], [1], [0, 0, 1, 1], [], []>} : vector<8x13xf32>, vector<13x256xf32>, vector<8x256xf32> -> vector<8x256xf32>
    %4 = vector.extract_strided_slice %0 {offsets = [0, 0], sizes = [1, 256], strides = [1, 1]} : vector<4x512xf32> to vector<1x256xf32>
    %5 = vector.broadcast %4 : vector<1x256xf32> to vector<8x256xf32>
    %6 = arith.addf %3, %5 : vector<8x256xf32>
    %cst_5 = arith.constant 0.000000e+00 : f32
    %7 = vector.broadcast %cst_5 : f32 to vector<8x256xf32>
    %8 = arith.maximumf %6, %7 : vector<8x256xf32>
    %c0_6 = arith.constant 0 : index
    %c0_7 = arith.constant 0 : index
    %9 = vector.load %arg1[%c0_6, %c0_7] : memref<8x4xf32, #tpu.memory_space<vmem>>, vector<8x4xf32>
    %c0_8 = arith.constant 0 : index
    %c0_9 = arith.constant 0 : index
    %10 = vector.load %arg3[%c0_8, %c0_9] : memref<4x256xf32, #tpu.memory_space<vmem>>, vector<4x256xf32>
    %cst_10 = arith.constant dense<0.000000e+00> : vector<8x256xf32>
    %11 = tpu.matmul %9, %10, %cst_10 {dimension_numbers = #tpu.dot_dimension_numbers<[1], [0], [0], [1], [0, 0, 1, 1], [], []>} : vector<8x4xf32>, vector<4x256xf32>, vector<8x256xf32> -> vector<8x256xf32>
    %c0_11 = arith.constant 0 : index
    %c0_12 = arith.constant 0 : index
    %12 = vector.load %arg4[%c0_11, %c0_12] : memref<256x512xf32, #tpu.memory_space<vmem>>, vector<256x512xf32>
    %cst_13 = arith.constant dense<0.000000e+00> : vector<8x512xf32>
    %13 = tpu.matmul %8, %12, %cst_13 {dimension_numbers = #tpu.dot_dimension_numbers<[1], [0], [0], [1], [0, 0, 1, 1], [], []>} : vector<8x256xf32>, vector<256x512xf32>, vector<8x512xf32> -> vector<8x512xf32>
    %14 = vector.extract_strided_slice %0 {offsets = [1, 0], sizes = [1, 512], strides = [1, 1]} : vector<4x512xf32> to vector<1x512xf32>
    %15 = vector.broadcast %14 : vector<1x512xf32> to vector<8x512xf32>
    %16 = arith.addf %13, %15 : vector<8x512xf32>
    %17 = vector.extract_strided_slice %16 {offsets = [0, 0], sizes = [8, 256], strides = [1, 1]} : vector<8x512xf32> to vector<8x256xf32>
    %18 = arith.addf %17, %11 : vector<8x256xf32>
    %cst_14 = arith.constant 0.000000e+00 : f32
    %19 = vector.broadcast %cst_14 : f32 to vector<8x256xf32>
    %20 = arith.maximumf %18, %19 : vector<8x256xf32>
    %21 = vector.extract_strided_slice %16 {offsets = [0, 256], sizes = [8, 256], strides = [1, 1]} : vector<8x512xf32> to vector<8x256xf32>
    %cst_15 = arith.constant 0.000000e+00 : f32
    %22 = vector.broadcast %cst_15 : f32 to vector<8x256xf32>
    %23 = arith.maximumf %21, %22 : vector<8x256xf32>
    %c0_16 = arith.constant 0 : index
    %c0_17 = arith.constant 0 : index
    %24 = vector.load %arg5[%c0_16, %c0_17] : memref<256x512xf32, #tpu.memory_space<vmem>>, vector<256x256xf32>
    %cst_18 = arith.constant dense<0.000000e+00> : vector<8x256xf32>
    %25 = tpu.matmul %20, %24, %cst_18 {dimension_numbers = #tpu.dot_dimension_numbers<[1], [0], [0], [1], [0, 0, 1, 1], [], []>} : vector<8x256xf32>, vector<256x256xf32>, vector<8x256xf32> -> vector<8x256xf32>
    %26 = vector.extract_strided_slice %0 {offsets = [2, 0], sizes = [1, 256], strides = [1, 1]} : vector<4x512xf32> to vector<1x256xf32>
    %27 = vector.broadcast %26 : vector<1x256xf32> to vector<8x256xf32>
    %28 = arith.addf %25, %27 : vector<8x256xf32>
    %cst_19 = arith.constant 0.000000e+00 : f32
    %29 = vector.broadcast %cst_19 : f32 to vector<8x256xf32>
    %30 = arith.maximumf %28, %29 : vector<8x256xf32>
    %c0_20 = arith.constant 0 : index
    %c256 = arith.constant 256 : index
    %31 = vector.load %arg5[%c0_20, %c256] : memref<256x512xf32, #tpu.memory_space<vmem>>, vector<256x256xf32>
    %cst_21 = arith.constant dense<0.000000e+00> : vector<8x256xf32>
    %32 = tpu.matmul %23, %31, %cst_21 {dimension_numbers = #tpu.dot_dimension_numbers<[1], [0], [0], [1], [0, 0, 1, 1], [], []>} : vector<8x256xf32>, vector<256x256xf32>, vector<8x256xf32> -> vector<8x256xf32>
    %33 = vector.extract_strided_slice %0 {offsets = [2, 256], sizes = [1, 256], strides = [1, 1]} : vector<4x512xf32> to vector<1x256xf32>
    %34 = vector.broadcast %33 : vector<1x256xf32> to vector<8x256xf32>
    %35 = arith.addf %32, %34 : vector<8x256xf32>
    %cst_22 = arith.constant 0.000000e+00 : f32
    %36 = vector.broadcast %cst_22 : f32 to vector<8x256xf32>
    %37 = arith.maximumf %35, %36 : vector<8x256xf32>
    %c0_23 = arith.constant 0 : index
    %c0_24 = arith.constant 0 : index
    %38 = vector.load %arg6[%c0_23, %c0_24] : memref<512x128xf32, #tpu.memory_space<vmem>>, vector<256x128xf32>
    %cst_25 = arith.constant dense<0.000000e+00> : vector<8x128xf32>
    %39 = tpu.matmul %30, %38, %cst_25 {dimension_numbers = #tpu.dot_dimension_numbers<[1], [0], [0], [1], [0, 0, 1, 1], [], []>} : vector<8x256xf32>, vector<256x128xf32>, vector<8x128xf32> -> vector<8x128xf32>
    %c256_26 = arith.constant 256 : index
    %c0_27 = arith.constant 0 : index
    %40 = vector.load %arg6[%c256_26, %c0_27] : memref<512x128xf32, #tpu.memory_space<vmem>>, vector<256x128xf32>
    %cst_28 = arith.constant dense<0.000000e+00> : vector<8x128xf32>
    %41 = tpu.matmul %37, %40, %cst_28 {dimension_numbers = #tpu.dot_dimension_numbers<[1], [0], [0], [1], [0, 0, 1, 1], [], []>} : vector<8x256xf32>, vector<256x128xf32>, vector<8x128xf32> -> vector<8x128xf32>
    %42 = arith.addf %39, %41 : vector<8x128xf32>
    %43 = vector.extract_strided_slice %0 {offsets = [3, 0], sizes = [1, 128], strides = [1, 1]} : vector<4x512xf32> to vector<1x128xf32>
    %44 = vector.broadcast %43 : vector<1x128xf32> to vector<8x128xf32>
    %45 = arith.addf %42, %44 : vector<8x128xf32>
    %c0_29 = arith.constant 0 : index
    %c0_30 = arith.constant 0 : index
    %46 = vector.load %arg8[%c0_29, %c0_30] : memref<8x128xf32, #tpu.memory_space<vmem>>, vector<8x128xf32>
    tpu.vector_store %arg8[%c0_29, %c0_30], %45 {strides = array<i32>} : memref<8x128xf32, #tpu.memory_space<vmem>>, vector<8x128xf32>,
    return
  }
}

</mosaic_0001>

<llo_original>
// kernel: tpu_custom_call.1
$region0: #{tpu_custom_call.1}
  #allocation0 [shape = 'u32[]', space=smem, size = 0x4, offset = 0x4, fixed_abs, tag = 'smem constant byte address 0x4 - core index']
  #allocation1 [shape = 'u32[144,128]{1,0:T(1,128)}', space=vmem, size = 0x12000, scoped, tag = 'internal scratch']
  %s0 = inlined_call_operand.vmem [shape: f32[8,13], index: 0, kind: input, shape index: {}]
  %s1 = inlined_call_operand.vmem [shape: f32[8,4], index: 1, kind: input, shape index: {}]
  %s2 = inlined_call_operand.hbm [shape: f32[13,256], index: 2, kind: input, shape index: {}]
  %s3 = inlined_call_operand.hbm [shape: f32[4,256], index: 3, kind: input, shape index: {}]
  %s4 = inlined_call_operand.hbm [shape: f32[256,512], index: 4, kind: input, shape index: {}]
  %s5 = inlined_call_operand.hbm [shape: f32[256,512], index: 5, kind: input, shape index: {}]
  %s6 = inlined_call_operand.hbm [shape: f32[512,128], index: 6, kind: input, shape index: {}]
  %s7 = inlined_call_operand.vmem [shape: f32[4,512], index: 7, kind: input, shape index: {}]
  %s8 = inlined_call_operand.hbm [shape: f32[8,128], index: 8, kind: output, shape index: {}]
  %s9 = sld [smem:[#allocation0]]
  $region62: #{tpu_custom_call.1} parent=0
    _
  %s11 = ssub.s32 1, %s9
  %s12 = scalar_select 0, %s11, %s9
  $region1: #{tpu_custom_call.1} parent=0
    #allocation2 [shape = 'u8[16384]{0}', space=vmem, size = 0x4000, scoped, tag = 'input window, operand 2, single buffered']
    #allocation3 [shape = 's32[1]{0}', space=sflag, size = 0x4, scoped, tag = 'scoped memory for tpu_custom_call.1']
    #allocation4 [shape = 's32[1]{0}', space=sflag, size = 0x4, scoped, tag = 'scoped memory for tpu_custom_call.1']
    #allocation5 [shape = 'u8[4096]{0}', space=vmem, size = 0x1000, scoped, tag = 'input window, operand 3, single buffered']
    #allocation6 [shape = 's32[1]{0}', space=sflag, size = 0x4, scoped, tag = 'scoped memory for tpu_custom_call.1']
    #allocation7 [shape = 'u8[524288]{0}', space=vmem, size = 0x80000, scoped, tag = 'input window, operand 4, single buffered']
    #allocation8 [shape = 'u8[524288]{0}', space=vmem, size = 0x80000, scoped, tag = 'input window, operand 5, single buffered']
    #allocation9 [shape = 's32[1]{0}', space=sflag, size = 0x4, scoped, tag = 'scoped memory for tpu_custom_call.1']
    #allocation10 [shape = 'u8[262144]{0}', space=vmem, size = 0x40000, scoped, tag = 'input window, operand 6, single buffered']
    #allocation11 [shape = 'u8[4096]{0}', space=vmem, size = 0x1000, scoped, tag = 'output window, operand 0, single buffered']
    %13 = vsyncpa [#allocation3], 0
    %14 = vsyncpa [#allocation6], 0
    %15 = vsyncpa [#allocation9], 0
    %16 = vsyncpa [#allocation4], 0
    // Predicated region
    $region2: #{tpu_custom_call.1} parent=1 // pred_check
      _
    $region3: #{tpu_custom_call.1} parent=1 // pred_check_branch
      %18 = sbr.rel (0) target = $region5
    $region4: #{tpu_custom_call.1} parent=1 // pred_region
      _
    $region5: #{tpu_custom_call.1} parent=1 // pred_fallthru
      _
    // Predicated region
    $region6: #{tpu_custom_call.1} parent=1 // pred_check
      _
    $region7: #{tpu_custom_call.1} parent=1 // pred_check_branch
      %20 = sbr.rel (0) target = $region9
    $region8: #{tpu_custom_call.1} parent=1 // pred_region
      _
    $region9: #{tpu_custom_call.1} parent=1 // pred_fallthru
      _
    // Predicated region
    $region10: #{tpu_custom_call.1} parent=1 // pred_check
      _
    $region11: #{tpu_custom_call.1} parent=1 // pred_check_branch
      %22 = sbr.rel (0) target = $region13
    $region12: #{tpu_custom_call.1} parent=1 // pred_region
      %s24 = ssub.s32 512, 512
      %25 = vsyncadd [#allocation3], %s24
      %s26 = sshll.u32 [#allocation2], 4
      %s27 = int_to_ptr.vmem [resolvable:$true] %s26
      %32 = dma.hbm_to_vmem [thread:$0]  %s2, 512, %s27, [#allocation3], 256, 256, 16
    $region13: #{tpu_custom_call.1} parent=1 // pred_fallthru
      _
    // Predicated region
    $region14: #{tpu_custom_call.1} parent=1 // pred_check
      _
    $region15: #{tpu_custom_call.1} parent=1 // pred_check_branch
      %34 = sbr.rel (0) target = $region17
    $region16: #{tpu_custom_call.1} parent=1 // pred_region
      %s36 = ssub.s32 128, 128
      %37 = vsyncadd [#allocation6], %s36
      %s39 = sshll.u32 [#allocation5], 4
      %s40 = int_to_ptr.vmem [resolvable:$true] %s39
      %42 = dma.hbm_to_vmem [thread:$0]  %s3, 128, %s40, [#allocation6]
    $region17: #{tpu_custom_call.1} parent=1 // pred_fallthru
      _
    // Predicated region
    $region18: #{tpu_custom_call.1} parent=1 // pred_check
      _
    $region19: #{tpu_custom_call.1} parent=1 // pred_check_branch
      %44 = sbr.rel (0) target = $region21
    $region20: #{tpu_custom_call.1} parent=1 // pred_region
      %s46 = ssub.s32 16384, 16384
      %47 = vsyncadd [#allocation6], %s46
      %s48 = sshll.u32 [#allocation7], 4
      %s49 = int_to_ptr.vmem [resolvable:$true] %s48
      %54 = dma.hbm_to_vmem [thread:$0]  %s4, 16384, %s49, [#allocation6], 512, 512, 32
    $region21: #{tpu_custom_call.1} parent=1 // pred_fallthru
      _
    // Predicated region
    $region22: #{tpu_custom_call.1} parent=1 // pred_check
      _
    $region23: #{tpu_custom_call.1} parent=1 // pred_check_branch
      %56 = sbr.rel (0) target = $region25
    $region24: #{tpu_custom_call.1} parent=1 // pred_region
      %s58 = ssub.s32 16384, 16384
      %59 = vsyncadd [#allocation9], %s58
      %s60 = sshll.u32 [#allocation8], 4
      %s61 = int_to_ptr.vmem [resolvable:$true] %s60
      %66 = dma.hbm_to_vmem [thread:$0]  %s5, 16384, %s61, [#allocation9], 512, 512, 32
    $region25: #{tpu_custom_call.1} parent=1 // pred_fallthru
      _
    // Predicated region
    $region26: #{tpu_custom_call.1} parent=1 // pred_check
      _
    $region27: #{tpu_custom_call.1} parent=1 // pred_check_branch
      %68 = sbr.rel (0) target = $region29
    $region28: #{tpu_custom_call.1} parent=1 // pred_region
      %s70 = ssub.s32 8192, 8192
      %71 = vsyncadd [#allocation9], %s70
      %s72 = sshll.u32 [#allocation10], 4
      %s73 = int_to_ptr.vmem [resolvable:$true] %s72
      %78 = dma.hbm_to_vmem [thread:$0]  %s6, 8192, %s73, [#allocation9], 128, 128, 8
    $region29: #{tpu_custom_call.1} parent=1 // pred_fallthru
      _
    // Predicated region
    $region30: #{tpu_custom_call.1} parent=1 // pred_check
      _
    $region31: #{tpu_custom_call.1} parent=1 // pred_check_branch
      %80 = sbr.rel (0) target = $region33
    $region32: #{tpu_custom_call.1} parent=1 // pred_region
      _
    $region33: #{tpu_custom_call.1} parent=1 // pred_fallthru
      _
    // Predicated region
    $region34: #{tpu_custom_call.1} parent=1 // pred_check
      _
    $region35: #{tpu_custom_call.1} parent=1 // pred_check_branch
      %82 = sbr.rel (0) target = $region37
    $region36: #{tpu_custom_call.1} parent=1 // pred_region
      %83 = dma.done [#allocation3], 512
    $region37: #{tpu_custom_call.1} parent=1 // pred_fallthru
      _
    // Predicated region
    $region38: #{tpu_custom_call.1} parent=1 // pred_check
      _
    $region39: #{tpu_custom_call.1} parent=1 // pred_check_branch
      %85 = sbr.rel (0) target = $region41
    $region40: #{tpu_custom_call.1} parent=1 // pred_region
      %86 = dma.done [#allocation6], 128
    $region41: #{tpu_custom_call.1} parent=1 // pred_fallthru
      _
    // Predicated region
    $region42: #{tpu_custom_call.1} parent=1 // pred_check
      _
    $region43: #{tpu_custom_call.1} parent=1 // pred_check_branch
      %88 = sbr.rel (0) target = $region45
    $region44: #{tpu_custom_call.1} parent=1 // pred_region
      %89 = dma.done [#allocation6], 16384
    $region45: #{tpu_custom_call.1} parent=1 // pred_fallthru
      _
    // Predicated region
    $region46: #{tpu_custom_call.1} parent=1 // pred_check
      _
    $region47: #{tpu_custom_call.1} parent=1 // pred_check_branch
      %91 = sbr.rel (0) target = $region49
    $region48: #{tpu_custom_call.1} parent=1 // pred_region
      %92 = dma.done [#allocation9], 16384
    $region49: #{tpu_custom_call.1} parent=1 // pred_fallthru
      _
    // Predicated region
    $region50: #{tpu_custom_call.1} parent=1 // pred_check
      _
    $region51: #{tpu_custom_call.1} parent=1 // pred_check_branch
      %94 = sbr.rel (0) target = $region53
    $region52: #{tpu_custom_call.1} parent=1 // pred_region
      %95 = dma.done [#allocation9], 8192
    $region53: #{tpu_custom_call.1} parent=1 // pred_fallthru
      _
    %v96 = vld [vmem:[%s7] sm:$0xff]
    %v97 = vld [vmem:[%s7 + $0x8] sm:$0xff]
    %v98 = vld [vmem:[%s0] sm:$0xff]
    %v99 = vld [vmem:[#allocation2] sm:$0xff]
    %v100 = vld [vmem:[#allocation2 + $0x8] sm:$0xff]
    %v101 = vld [vmem:[#allocation2 + $0x10] sm:$0x1f]
    %v102 = vld [vmem:[#allocation2 + $0x18] sm:$0x1f]
    %v104 = vlaneseq
    %v105 = vshrl.u32 %v104, 7
    %v106 = vsub.s32 0, %v105
    %v107 = vrot.slane %v96, %v106
    %v108 = vlaneseq
    %v109 = vshrl.u32 %v108, 7
    %v110 = vsub.s32 4, %v109
    %v111 = vrot.slane %v96, %v110
    %v114 = vlaneseq
    %v115 = vshrl.u32 %v114, 7
    %v116 = vsub.s32 0, %v115
    %v117 = vrot.slane %v107, %v116
    %v118 = vlaneseq
    %v119 = vshrl.u32 %v118, 7
    %v120 = vsub.s32 0, %v119
    %v121 = vrot.slane %v111, %v120
    %vm122 = vcmask 105472
    %v124 = vsel %vm122, %v98, 0
    %vm126 = vcmask 1044480
    %v128 = vsel %vm126, %v101, 0
    %v131 = vsel %vm126, %v102, 0
    %133 = vmatprep.subr.mxu0 0.0
    %134 = vmatpush1.msra.mxu0 0.0
    %135 = vmatprep.subr.mxu0 0.0
    %136 = vmatpush1.msra.mxu0 0.0
    %137 = vmatprep.subr.mxu0 0.0
    %138 = vmatpush1.msra.mxu0 0.0
    %139 = vmatprep.subr.mxu0 0.0
    %140 = vmatpush1.msra.mxu0 0.0
    %141 = vmatprep.subr.mxu0 0.0
    %142 = vmatpush1.msra.mxu0 0.0
    %143 = vmatprep.subr.mxu0 0.0
    %144 = vmatpush1.msra.mxu0 0.0
    %145 = vmatprep.subr.mxu0 0.0
    %146 = vmatpush1.msra.mxu0 0.0
    %147 = vmatprep.subr.mxu0 0.0
    %148 = vmatpush1.msra.mxu0 0.0
    %149 = vmatprep.subr.mxu0 0.0
    %150 = vmatpush1.msra.mxu0 0.0
    %151 = vmatprep.subr.mxu0 0.0
    %152 = vmatpush1.msra.mxu0 0.0
    %153 = vmatprep.subr.mxu0 0.0
    %154 = vmatpush1.msra.mxu0 0.0
    %155 = vmatprep.subr.mxu0 0.0
    %156 = vmatpush1.msra.mxu0 0.0
    %157 = vmatprep.subr.mxu0 0.0
    %158 = vmatpush1.msra.mxu0 0.0
    %159 = vmatprep.subr.mxu0 0.0
    %160 = vmatpush1.msra.mxu0 0.0
    %161 = vmatprep.subr.mxu0 %v131
    %162 = vmatpush1.msra.mxu0 %v128
    %163 = vmatprep.subr.mxu0 %v100
    %164 = vmatpush1.msra.mxu0 %v99
    %165 = vmatprep.subr.mxu0 0.0
    %166 = vmatpush2.msra.mxu0 0.0
    %167 = vmatprep.subr.mxu0 0.0
    %168 = vmatpush2.msra.mxu0 0.0
    %169 = vmatprep.subr.mxu0 0.0
    %170 = vmatpush2.msra.mxu0 0.0
    %171 = vmatprep.subr.mxu0 0.0
    %172 = vmatpush2.msra.mxu0 0.0
    %173 = vmatprep.subr.mxu0 0.0
    %174 = vmatpush2.msra.mxu0 0.0
    %175 = vmatprep.subr.mxu0 0.0
    %176 = vmatpush2.msra.mxu0 0.0
    %177 = vmatprep.subr.mxu0 0.0
    %178 = vmatpush2.msra.mxu0 0.0
    %179 = vmatprep.subr.mxu0 0.0
    %180 = vmatpush2.msra.mxu0 0.0
    %181 = vmatprep.subr.mxu0 0.0
    %182 = vmatpush2.msra.mxu0 0.0
    %183 = vmatprep.subr.mxu0 0.0
    %184 = vmatpush2.msra.mxu0 0.0
    %185 = vmatprep.subr.mxu0 0.0
    %186 = vmatpush2.msra.mxu0 0.0
    %187 = vmatprep.subr.mxu0 0.0
    %188 = vmatpush2.msra.mxu0 0.0
    %189 = vmatprep.subr.mxu0 0.0
    %190 = vmatpush2.msra.mxu0 0.0
    %191 = vmatprep.subr.mxu0 0.0
    %192 = vmatpush2.msra.mxu0 0.0
    %193 = vmatprep.subr.mxu0 0.0
    %194 = vmatpush2.msra.mxu0 0.0
    %195 = vmatprep.subr.mxu0 0.0
    %196 = vmatpush2.msra.mxu0 0.0
    %197 = vmatprep.mubr.f32.mxu0 0.0
    %198 = vmatmul.mubr.f32.gmra.mxu0 %v124
    %v199 = vpop.f32.mrf.mxu0
    %v200 = vadd.f32 %v117, %v199
    %v201 = vpop.f32.mrf.mxu0
    %v202 = vadd.f32 %v121, %v201
    %203 = vdwg.mxu0
    %v204 = vmax.f32 %v200, 0.0
    %v205 = vmax.f32 %v202, 0.0
    %v206 = vld [vmem:[%s1] sm:$0xff]
    %v207 = vld [vmem:[#allocation5] sm:$0xff]
    %v209 = vcombine.high %v207, %v207
    %vm210 = vcmask 31744
    %v212 = vsel %vm210, %v206, 0
    %vm214 = vcmask 1043456
    %v215 = vsel %vm214, %v207, 0
    %v217 = vsel %vm214, %v209, 0
    %219 = vmatprep.subr.mxu0 0.0
    %220 = vmatpush1.msra.mxu0 0.0
    %221 = vmatprep.subr.mxu0 0.0
    %222 = vmatpush1.msra.mxu0 0.0
    %223 = vmatprep.subr.mxu0 0.0
    %224 = vmatpush1.msra.mxu0 0.0
    %225 = vmatprep.subr.mxu0 0.0
    %226 = vmatpush1.msra.mxu0 0.0
    %227 = vmatprep.subr.mxu0 0.0
    %228 = vmatpush1.msra.mxu0 0.0
    %229 = vmatprep.subr.mxu0 0.0
    %230 = vmatpush1.msra.mxu0 0.0
    %231 = vmatprep.subr.mxu0 0.0
    %232 = vmatpush1.msra.mxu0 0.0
    %233 = vmatprep.subr.mxu0 0.0
    %234 = vmatpush1.msra.mxu0 0.0
    %235 = vmatprep.subr.mxu0 0.0
    %236 = vmatpush1.msra.mxu0 0.0
    %237 = vmatprep.subr.mxu0 0.0
    %238 = vmatpush1.msra.mxu0 0.0
    %239 = vmatprep.subr.mxu0 0.0
    %240 = vmatpush1.msra.mxu0 0.0
    %241 = vmatprep.subr.mxu0 0.0
    %242 = vmatpush1.msra.mxu0 0.0
    %243 = vmatprep.subr.mxu0 0.0
    %244 = vmatpush1.msra.mxu0 0.0
    %245 = vmatprep.subr.mxu0 0.0
    %246 = vmatpush1.msra.mxu0 0.0
    %247 = vmatprep.subr.mxu0 0.0
    %248 = vmatpush1.msra.mxu0 0.0
    %249 = vmatprep.subr.mxu0 %v217
    %250 = vmatpush1.msra.mxu0 %v215
    %251 = vmatprep.subr.mxu0 0.0
    %252 = vmatpush2.msra.mxu0 0.0
    %253 = vmatprep.subr.mxu0 0.0
    %254 = vmatpush2.msra.mxu0 0.0
    %255 = vmatprep.subr.mxu0 0.0
    %256 = vmatpush2.msra.mxu0 0.0
    %257 = vmatprep.subr.mxu0 0.0
    %258 = vmatpush2.msra.mxu0 0.0
    %259 = vmatprep.subr.mxu0 0.0
    %260 = vmatpush2.msra.mxu0 0.0
    %261 = vmatprep.subr.mxu0 0.0
    %262 = vmatpush2.msra.mxu0 0.0
    %263 = vmatprep.subr.mxu0 0.0
    %264 = vmatpush2.msra.mxu0 0.0
    %265 = vmatprep.subr.mxu0 0.0
    %266 = vmatpush2.msra.mxu0 0.0
    %267 = vmatprep.subr.mxu0 0.0
    %268 = vmatpush2.msra.mxu0 0.0
    %269 = vmatprep.subr.mxu0 0.0
    %270 = vmatpush2.msra.mxu0 0.0
    %271 = vmatprep.subr.mxu0 0.0
    %272 = vmatpush2.msra.mxu0 0.0
    %273 = vmatprep.subr.mxu0 0.0
    %274 = vmatpush2.msra.mxu0 0.0
    %275 = vmatprep.subr.mxu0 0.0
    %276 = vmatpush2.msra.mxu0 0.0
    %277 = vmatprep.subr.mxu0 0.0
    %278 = vmatpush2.msra.mxu0 0.0
    %279 = vmatprep.subr.mxu0 0.0
    %280 = vmatpush2.msra.mxu0 0.0
    %281 = vmatprep.subr.mxu0 0.0
    %282 = vmatpush2.msra.mxu0 0.0
    %283 = vmatprep.mubr.f32.mxu0 0.0
    %284 = vmatmul.mubr.f32.gmra.mxu0 %v212
    %v285 = vpop.f32.mrf.mxu0
    %v286 = vadd.f32 0.0, %v285
    %v287 = vpop.f32.mrf.mxu0
    %v288 = vadd.f32 0.0, %v287
    %289 = vdwg.mxu0
    %v290 = vld [vmem:[#allocation7] sm:$0xff]
    %v291 = vld [vmem:[#allocation7 + $0x8] sm:$0xff]
    %v292 = vld [vmem:[#allocation7 + $0x10] sm:$0xff]
    %v293 = vld [vmem:[#allocation7 + $0x18] sm:$0xff]
    %v294 = vld [vmem:[#allocation7 + $0x20] sm:$0xff]
    %v295 = vld [vmem:[#allocation7 + $0x28] sm:$0xff]
    %v296 = vld [vmem:[#allocation7 + $0x30] sm:$0xff]
    %v297 = vld [vmem:[#allocation7 + $0x38] sm:$0xff]
    %v298 = vld [vmem:[#allocation7 + $0x40] sm:$0xff]
    %v299 = vld [vmem:[#allocation7 + $0x48] sm:$0xff]
    %v300 = vld [vmem:[#allocation7 + $0x50] sm:$0xff]
    %v301 = vld [vmem:[#allocation7 + $0x58] sm:$0xff]
    %v302 = vld [vmem:[#allocation7 + $0x60] sm:$0xff]
    %v303 = vld [vmem:[#allocation7 + $0x68] sm:$0xff]
    %v304 = vld [vmem:[#allocation7 + $0x70] sm:$0xff]
    %v305 = vld [vmem:[#allocation7 + $0x78] sm:$0xff]
    %v306 = vld [vmem:[#allocation7 + $0x80] sm:$0xff]
    %v307 = vld [vmem:[#allocation7 + $0x88] sm:$0xff]
    %v308 = vld [vmem:[#allocation7 + $0x90] sm:$0xff]
    %v309 = vld [vmem:[#allocation7 + $0x98] sm:$0xff]
    %v310 = vld [vmem:[#allocation7 + $0xa0] sm:$0xff]
    %v311 = vld [vmem:[#allocation7 + $0xa8] sm:$0xff]
    %v312 = vld [vmem:[#allocation7 + $0xb0] sm:$0xff]
    %v313 = vld [vmem:[#allocation7 + $0xb8] sm:$0xff]
    %v314 = vld [vmem:[#allocation7 + $0xc0] sm:$0xff]
    %v315 = vld [vmem:[#allocation7 + $0xc8] sm:$0xff]
    %v316 = vld [vmem:[#allocation7 + $0xd0] sm:$0xff]
    %v317 = vld [vmem:[#allocation7 + $0xd8] sm:$0xff]
    %v318 = vld [vmem:[#allocation7 + $0xe0] sm:$0xff]
    %v319 = vld [vmem:[#allocation7 + $0xe8] sm:$0xff]
    %v320 = vld [vmem:[#allocation7 + $0xf0] sm:$0xff]
    %v321 = vld [vmem:[#allocation7 + $0xf8] sm:$0xff]
    %v322 = vld [vmem:[#allocation7 + $0x100] sm:$0xff]
    %v323 = vld [vmem:[#allocation7 + $0x108] sm:$0xff]
    %v324 = vld [vmem:[#allocation7 + $0x110] sm:$0xff]
    %v325 = vld [vmem:[#allocation7 + $0x118] sm:$0xff]
    %v326 = vld [vmem:[#allocation7 + $0x120] sm:$0xff]
    %v327 = vld [vmem:[#allocation7 + $0x128] sm:$0xff]
    %v328 = vld [vmem:[#allocation7 + $0x130] sm:$0xff]
    %v329 = vld [vmem:[#allocation7 + $0x138] sm:$0xff]
    %v330 = vld [vmem:[#allocation7 + $0x140] sm:$0xff]
    %v331 = vld [vmem:[#allocation7 + $0x148] sm:$0xff]
    %v332 = vld [vmem:[#allocation7 + $0x150] sm:$0xff]
    %v333 = vld [vmem:[#allocation7 + $0x158] sm:$0xff]
    %v334 = vld [vmem:[#allocation7 + $0x160] sm:$0xff]
    %v335 = vld [vmem:[#allocation7 + $0x168] sm:$0xff]
    %v336 = vld [vmem:[#allocation7 + $0x170] sm:$0xff]
    %v337 = vld [vmem:[#allocation7 + $0x178] sm:$0xff]
    %v338 = vld [vmem:[#allocation7 + $0x180] sm:$0xff]
    %v339 = vld [vmem:[#allocation7 + $0x188] sm:$0xff]
    %v340 = vld [vmem:[#allocation7 + $0x190] sm:$0xff]
    %v341 = vld [vmem:[#allocation7 + $0x198] sm:$0xff]
    %v342 = vld [vmem:[#allocation7 + $0x1a0] sm:$0xff]
    %v343 = vld [vmem:[#allocation7 + $0x1a8] sm:$0xff]
    %v344 = vld [vmem:[#allocation7 + $0x1b0] sm:$0xff]
    %v345 = vld [vmem:[#allocation7 + $0x1b8] sm:$0xff]
    %v346 = vld [vmem:[#allocation7 + $0x1c0] sm:$0xff]
    %v347 = vld [vmem:[#allocation7 + $0x1c8] sm:$0xff]
    %v348 = vld [vmem:[#allocation7 + $0x1d0] sm:$0xff]
    %v349 = vld [vmem:[#allocation7 + $0x1d8] sm:$0xff]
    %v350 = vld [vmem:[#allocation7 + $0x1e0] sm:$0xff]
    %v351 = vld [vmem:[#allocation7 + $0x1e8] sm:$0xff]
    %v352 = vld [vmem:[#allocation7 + $0x1f0] sm:$0xff]
    %v353 = vld [vmem:[#allocation7 + $0x1f8] sm:$0xff]
    %v354 = vld [vmem:[#allocation7 + $0x200] sm:$0xff]
    %v355 = vld [vmem:[#allocation7 + $0x208] sm:$0xff]
    %v356 = vld [vmem:[#allocation7 + $0x210] sm:$0xff]
    %v357 = vld [vmem:[#allocation7 + $0x218] sm:$0xff]
    %v358 = vld [vmem:[#allocation7 + $0x220] sm:$0xff]
    %v359 = vld [vmem:[#allocation7 + $0x228] sm:$0xff]
    %v360 = vld [vmem:[#allocation7 + $0x230] sm:$0xff]
    %v361 = vld [vmem:[#allocation7 + $0x238] sm:$0xff]
    %v362 = vld [vmem:[#allocation7 + $0x240] sm:$0xff]
    %v363 = vld [vmem:[#allocation7 + $0x248] sm:$0xff]
    %v364 = vld [vmem:[#allocation7 + $0x250] sm:$0xff]
    %v365 = vld [vmem:[#allocation7 + $0x258] sm:$0xff]
    %v366 = vld [vmem:[#allocation7 + $0x260] sm:$0xff]
    %v367 = vld [vmem:[#allocation7 + $0x268] sm:$0xff]
    %v368 = vld [vmem:[#allocation7 + $0x270] sm:$0xff]
    %v369 = vld [vmem:[#allocation7 + $0x278] sm:$0xff]
    %v370 = vld [vmem:[#allocation7 + $0x280] sm:$0xff]
    %v371 = vld [vmem:[#allocation7 + $0x288] sm:$0xff]
    %v372 = vld [vmem:[#allocation7 + $0x290] sm:$0xff]
    %v373 = vld [vmem:[#allocation7 + $0x298] sm:$0xff]
    %v374 = vld [vmem:[#allocation7 + $0x2a0] sm:$0xff]
    %v375 = vld [vmem:[#allocation7 + $0x2a8] sm:$0xff]
    %v376 = vld [vmem:[#allocation7 + $0x2b0] sm:$0xff]
    %v377 = vld [vmem:[#allocation7 + $0x2b8] sm:$0xff]
    %v378 = vld [vmem:[#allocation7 + $0x2c0] sm:$0xff]
    %v379 = vld [vmem:[#allocation7 + $0x2c8] sm:$0xff]
    %v380 = vld [vmem:[#allocation7 + $0x2d0] sm:$0xff]
    %v381 = vld [vmem:[#allocation7 + $0x2d8] sm:$0xff]
    %v382 = vld [vmem:[#allocation7 + $0x2e0] sm:$0xff]
    %v383 = vld [vmem:[#allocation7 + $0x2e8] sm:$0xff]
    %v384 = vld [vmem:[#allocation7 + $0x2f0] sm:$0xff]
    %v385 = vld [vmem:[#allocation7 + $0x2f8] sm:$0xff]
    %v386 = vld [vmem:[#allocation7 + $0x300] sm:$0xff]
    %v387 = vld [vmem:[#allocation7 + $0x308] sm:$0xff]
    %v388 = vld [vmem:[#allocation7 + $0x310] sm:$0xff]
    %v389 = vld [vmem:[#allocation7 + $0x318] sm:$0xff]
    %v390 = vld [vmem:[#allocation7 + $0x320] sm:$0xff]
    %v391 = vld [vmem:[#allocation7 + $0x328] sm:$0xff]
    %v392 = vld [vmem:[#allocation7 + $0x330] sm:$0xff]
    %v393 = vld [vmem:[#allocation7 + $0x338] sm:$0xff]
    %v394 = vld [vmem:[#allocation7 + $0x340] sm:$0xff]
    %v395 = vld [vmem:[#allocation7 + $0x348] sm:$0xff]
    %v396 = vld [vmem:[#allocation7 + $0x350] sm:$0xff]
    %v397 = vld [vmem:[#allocation7 + $0x358] sm:$0xff]
    %v398 = vld [vmem:[#allocation7 + $0x360] sm:$0xff]
    %v399 = vld [vmem:[#allocation7 + $0x368] sm:$0xff]
    %v400 = vld [vmem:[#allocation7 + $0x370] sm:$0xff]
    %v401 = vld [vmem:[#allocation7 + $0x378] sm:$0xff]
    %v402 = vld [vmem:[#allocation7 + $0x380] sm:$0xff]
    %v403 = vld [vmem:[#allocation7 + $0x388] sm:$0xff]
    %v404 = vld [vmem:[#allocation7 + $0x390] sm:$0xff]
    %v405 = vld [vmem:[#allocation7 + $0x398] sm:$0xff]
    %v406 = vld [vmem:[#allocation7 + $0x3a0] sm:$0xff]
    %v407 = vld [vmem:[#allocation7 + $0x3a8] sm:$0xff]
    %v408 = vld [vmem:[#allocation7 + $0x3b0] sm:$0xff]
    %v409 = vld [vmem:[#allocation7 + $0x3b8] sm:$0xff]
    %v410 = vld [vmem:[#allocation7 + $0x3c0] sm:$0xff]
    %v411 = vld [vmem:[#allocation7 + $0x3c8] sm:$0xff]
    %v412 = vld [vmem:[#allocation7 + $0x3d0] sm:$0xff]
    %v413 = vld [vmem:[#allocation7 + $0x3d8] sm:$0xff]
    %v414 = vld [vmem:[#allocation7 + $0x3e0] sm:$0xff]
    %v415 = vld [vmem:[#allocation7 + $0x3e8] sm:$0xff]
    %v416 = vld [vmem:[#allocation7 + $0x3f0] sm:$0xff]
    %v417 = vld [vmem:[#allocation7 + $0x3f8] sm:$0xff]
    %v419 = vlaneseq
    %v420 = vshrl.u32 %v419, 7
    %v421 = vsub.s32 1, %v420
    %v422 = vrot.slane %v96, %v421
    %v423 = vlaneseq
    %v424 = vshrl.u32 %v423, 7
    %v425 = vsub.s32 5, %v424
    %v426 = vrot.slane %v96, %v425
    %v427 = vlaneseq
    %v428 = vshrl.u32 %v427, 7
    %v429 = vsub.s32 1, %v428
    %v430 = vrot.slane %v97, %v429
    %v431 = vlaneseq
    %v432 = vshrl.u32 %v431, 7
    %v433 = vsub.s32 5, %v432
    %v434 = vrot.slane %v97, %v433
    %v439 = vlaneseq
    %v440 = vshrl.u32 %v439, 7
    %v441 = vsub.s32 1, %v440
    %v442 = vrot.slane %v422, %v441
    %v443 = vlaneseq
    %v444 = vshrl.u32 %v443, 7
    %v445 = vsub.s32 1, %v444
    %v446 = vrot.slane %v426, %v445
    %v447 = vlaneseq
    %v448 = vshrl.u32 %v447, 7
    %v449 = vsub.s32 1, %v448
    %v450 = vrot.slane %v430, %v449
    %v451 = vlaneseq
    %v452 = vshrl.u32 %v451, 7
    %v453 = vsub.s32 1, %v452
    %v454 = vrot.slane %v434, %v453
    %455 = vmatprep.subr.mxu0 %v351
    %456 = vmatpush1.msra.mxu0 %v350
    %457 = vmatprep.subr.mxu0 %v347
    %458 = vmatpush1.msra.mxu0 %v346
    %459 = vmatprep.subr.mxu0 %v343
    %460 = vmatpush1.msra.mxu0 %v342
    %461 = vmatprep.subr.mxu0 %v339
    %462 = vmatpush1.msra.mxu0 %v338
    %463 = vmatprep.subr.mxu0 %v335
    %464 = vmatpush1.msra.mxu0 %v334
    %465 = vmatprep.subr.mxu0 %v331
    %466 = vmatpush1.msra.mxu0 %v330
    %467 = vmatprep.subr.mxu0 %v327
    %468 = vmatpush1.msra.mxu0 %v326
    %469 = vmatprep.subr.mxu0 %v323
    %470 = vmatpush1.msra.mxu0 %v322
    %471 = vmatprep.subr.mxu0 %v319
    %472 = vmatpush1.msra.mxu0 %v318
    %473 = vmatprep.subr.mxu0 %v315
    %474 = vmatpush1.msra.mxu0 %v314
    %475 = vmatprep.subr.mxu0 %v311
    %476 = vmatpush1.msra.mxu0 %v310
    %477 = vmatprep.subr.mxu0 %v307
    %478 = vmatpush1.msra.mxu0 %v306
    %479 = vmatprep.subr.mxu0 %v303
    %480 = vmatpush1.msra.mxu0 %v302
    %481 = vmatprep.subr.mxu0 %v299
    %482 = vmatpush1.msra.mxu0 %v298
    %483 = vmatprep.subr.mxu0 %v295
    %484 = vmatpush1.msra.mxu0 %v294
    %485 = vmatprep.subr.mxu0 %v291
    %486 = vmatpush1.msra.mxu0 %v290
    %487 = vmatprep.subr.mxu0 %v415
    %488 = vmatpush2.msra.mxu0 %v414
    %489 = vmatprep.subr.mxu0 %v411
    %490 = vmatpush2.msra.mxu0 %v410
    %491 = vmatprep.subr.mxu0 %v407
    %492 = vmatpush2.msra.mxu0 %v406
    %493 = vmatprep.subr.mxu0 %v403
    %494 = vmatpush2.msra.mxu0 %v402
    %495 = vmatprep.subr.mxu0 %v399
    %496 = vmatpush2.msra.mxu0 %v398
    %497 = vmatprep.subr.mxu0 %v395
    %498 = vmatpush2.msra.mxu0 %v394
    %499 = vmatprep.subr.mxu0 %v391
    %500 = vmatpush2.msra.mxu0 %v390
    %501 = vmatprep.subr.mxu0 %v387
    %502 = vmatpush2.msra.mxu0 %v386
    %503 = vmatprep.subr.mxu0 %v383
    %504 = vmatpush2.msra.mxu0 %v382
    %505 = vmatprep.subr.mxu0 %v379
    %506 = vmatpush2.msra.mxu0 %v378
    %507 = vmatprep.subr.mxu0 %v375
    %508 = vmatpush2.msra.mxu0 %v374
    %509 = vmatprep.subr.mxu0 %v371
    %510 = vmatpush2.msra.mxu0 %v370
    %511 = vmatprep.subr.mxu0 %v367
    %512 = vmatpush2.msra.mxu0 %v366
    %513 = vmatprep.subr.mxu0 %v363
    %514 = vmatpush2.msra.mxu0 %v362
    %515 = vmatprep.subr.mxu0 %v359
    %516 = vmatpush2.msra.mxu0 %v358
    %517 = vmatprep.subr.mxu0 %v355
    %518 = vmatpush2.msra.mxu0 %v354
    %519 = vmatprep.mubr.f32.mxu0 %v205
    %520 = vmatmul.mubr.f32.gmra.mxu0 %v204
    %v521 = vpop.f32.mrf.mxu0
    %v522 = vadd.f32 %v442, %v521
    %v523 = vpop.f32.mrf.mxu0
    %v524 = vadd.f32 %v446, %v523
    %525 = vdwg.mxu0
    %526 = vmatprep.subr.mxu0 %v353
    %527 = vmatpush1.msra.mxu0 %v352
    %528 = vmatprep.subr.mxu0 %v349
    %529 = vmatpush1.msra.mxu0 %v348
    %530 = vmatprep.subr.mxu0 %v345
    %531 = vmatpush1.msra.mxu0 %v344
    %532 = vmatprep.subr.mxu0 %v341
    %533 = vmatpush1.msra.mxu0 %v340
    %534 = vmatprep.subr.mxu0 %v337
    %535 = vmatpush1.msra.mxu0 %v336
    %536 = vmatprep.subr.mxu0 %v333
    %537 = vmatpush1.msra.mxu0 %v332
    %538 = vmatprep.subr.mxu0 %v329
    %539 = vmatpush1.msra.mxu0 %v328
    %540 = vmatprep.subr.mxu0 %v325
    %541 = vmatpush1.msra.mxu0 %v324
    %542 = vmatprep.subr.mxu0 %v321
    %543 = vmatpush1.msra.mxu0 %v320
    %544 = vmatprep.subr.mxu0 %v317
    %545 = vmatpush1.msra.mxu0 %v316
    %546 = vmatprep.subr.mxu0 %v313
    %547 = vmatpush1.msra.mxu0 %v312
    %548 = vmatprep.subr.mxu0 %v309
    %549 = vmatpush1.msra.mxu0 %v308
    %550 = vmatprep.subr.mxu0 %v305
    %551 = vmatpush1.msra.mxu0 %v304
    %552 = vmatprep.subr.mxu0 %v301
    %553 = vmatpush1.msra.mxu0 %v300
    %554 = vmatprep.subr.mxu0 %v297
    %555 = vmatpush1.msra.mxu0 %v296
    %556 = vmatprep.subr.mxu0 %v293
    %557 = vmatpush1.msra.mxu0 %v292
    %558 = vmatprep.subr.mxu0 %v417
    %559 = vmatpush2.msra.mxu0 %v416
    %560 = vmatprep.subr.mxu0 %v413
    %561 = vmatpush2.msra.mxu0 %v412
    %562 = vmatprep.subr.mxu0 %v409
    %563 = vmatpush2.msra.mxu0 %v408
    %564 = vmatprep.subr.mxu0 %v405
    %565 = vmatpush2.msra.mxu0 %v404
    %566 = vmatprep.subr.mxu0 %v401
    %567 = vmatpush2.msra.mxu0 %v400
    %568 = vmatprep.subr.mxu0 %v397
    %569 = vmatpush2.msra.mxu0 %v396
    %570 = vmatprep.subr.mxu0 %v393
    %571 = vmatpush2.msra.mxu0 %v392
    %572 = vmatprep.subr.mxu0 %v389
    %573 = vmatpush2.msra.mxu0 %v388
    %574 = vmatprep.subr.mxu0 %v385
    %575 = vmatpush2.msra.mxu0 %v384
    %576 = vmatprep.subr.mxu0 %v381
    %577 = vmatpush2.msra.mxu0 %v380
    %578 = vmatprep.subr.mxu0 %v377
    %579 = vmatpush2.msra.mxu0 %v376
    %580 = vmatprep.subr.mxu0 %v373
    %581 = vmatpush2.msra.mxu0 %v372
    %582 = vmatprep.subr.mxu0 %v369
    %583 = vmatpush2.msra.mxu0 %v368
    %584 = vmatprep.subr.mxu0 %v365
    %585 = vmatpush2.msra.mxu0 %v364
    %586 = vmatprep.subr.mxu0 %v361
    %587 = vmatpush2.msra.mxu0 %v360
    %588 = vmatprep.subr.mxu0 %v357
    %589 = vmatpush2.msra.mxu0 %v356
    %590 = vmatprep.mubr.f32.mxu0 %v205
    %591 = vmatmul.mubr.f32.gmra.mxu0 %v204
    %v592 = vpop.f32.mrf.mxu0
    %v593 = vadd.f32 %v450, %v592
    %v594 = vpop.f32.mrf.mxu0
    %v595 = vadd.f32 %v454, %v594
    %596 = vdwg.mxu0
    %v597 = vadd.f32 %v522, %v286
    %v598 = vadd.f32 %v524, %v288
    %v599 = vmax.f32 %v597, 0.0
    %v600 = vmax.f32 %v598, 0.0
    %v601 = vmax.f32 %v593, 0.0
    %v602 = vmax.f32 %v595, 0.0
    %v603 = vld [vmem:[#allocation8] sm:$0xff]
    %v604 = vld [vmem:[#allocation8 + $0x8] sm:$0xff]
    %v605 = vld [vmem:[#allocation8 + $0x20] sm:$0xff]
    %v606 = vld [vmem:[#allocation8 + $0x28] sm:$0xff]
    %v607 = vld [vmem:[#allocation8 + $0x40] sm:$0xff]
    %v608 = vld [vmem:[#allocation8 + $0x48] sm:$0xff]
    %v609 = vld [vmem:[#allocation8 + $0x60] sm:$0xff]
    %v610 = vld [vmem:[#allocation8 + $0x68] sm:$0xff]
    %v611 = vld [vmem:[#allocation8 + $0x80] sm:$0xff]
    %v612 = vld [vmem:[#allocation8 + $0x88] sm:$0xff]
    %v613 = vld [vmem:[#allocation8 + $0xa0] sm:$0xff]
    %v614 = vld [vmem:[#allocation8 + $0xa8] sm:$0xff]
    %v615 = vld [vmem:[#allocation8 + $0xc0] sm:$0xff]
    %v616 = vld [vmem:[#allocation8 + $0xc8] sm:$0xff]
    %v617 = vld [vmem:[#allocation8 + $0xe0] sm:$0xff]
    %v618 = vld [vmem:[#allocation8 + $0xe8] sm:$0xff]
    %v619 = vld [vmem:[#allocation8 + $0x100] sm:$0xff]
    %v620 = vld [vmem:[#allocation8 + $0x108] sm:$0xff]
    %v621 = vld [vmem:[#allocation8 + $0x120] sm:$0xff]
    %v622 = vld [vmem:[#allocation8 + $0x128] sm:$0xff]
    %v623 = vld [vmem:[#allocation8 + $0x140] sm:$0xff]
    %v624 = vld [vmem:[#allocation8 + $0x148] sm:$0xff]
    %v625 = vld [vmem:[#allocation8 + $0x160] sm:$0xff]
    %v626 = vld [vmem:[#allocation8 + $0x168] sm:$0xff]
    %v627 = vld [vmem:[#allocation8 + $0x180] sm:$0xff]
    %v628 = vld [vmem:[#allocation8 + $0x188] sm:$0xff]
    %v629 = vld [vmem:[#allocation8 + $0x1a0] sm:$0xff]
    %v630 = vld [vmem:[#allocation8 + $0x1a8] sm:$0xff]
    %v631 = vld [vmem:[#allocation8 + $0x1c0] sm:$0xff]
    %v632 = vld [vmem:[#allocation8 + $0x1c8] sm:$0xff]
    %v633 = vld [vmem:[#allocation8 + $0x1e0] sm:$0xff]
    %v634 = vld [vmem:[#allocation8 + $0x1e8] sm:$0xff]
    %v635 = vld [vmem:[#allocation8 + $0x200] sm:$0xff]
    %v636 = vld [vmem:[#allocation8 + $0x208] sm:$0xff]
    %v637 = vld [vmem:[#allocation8 + $0x220] sm:$0xff]
    %v638 = vld [vmem:[#allocation8 + $0x228] sm:$0xff]
    %v639 = vld [vmem:[#allocation8 + $0x240] sm:$0xff]
    %v640 = vld [vmem:[#allocation8 + $0x248] sm:$0xff]
    %v641 = vld [vmem:[#allocation8 + $0x260] sm:$0xff]
    %v642 = vld [vmem:[#allocation8 + $0x268] sm:$0xff]
    %v643 = vld [vmem:[#allocation8 + $0x280] sm:$0xff]
    %v644 = vld [vmem:[#allocation8 + $0x288] sm:$0xff]
    %v645 = vld [vmem:[#allocation8 + $0x2a0] sm:$0xff]
    %v646 = vld [vmem:[#allocation8 + $0x2a8] sm:$0xff]
    %v647 = vld [vmem:[#allocation8 + $0x2c0] sm:$0xff]
    %v648 = vld [vmem:[#allocation8 + $0x2c8] sm:$0xff]
    %v649 = vld [vmem:[#allocation8 + $0x2e0] sm:$0xff]
    %v650 = vld [vmem:[#allocation8 + $0x2e8] sm:$0xff]
    %v651 = vld [vmem:[#allocation8 + $0x300] sm:$0xff]
    %v652 = vld [vmem:[#allocation8 + $0x308] sm:$0xff]
    %v653 = vld [vmem:[#allocation8 + $0x320] sm:$0xff]
    %v654 = vld [vmem:[#allocation8 + $0x328] sm:$0xff]
    %v655 = vld [vmem:[#allocation8 + $0x340] sm:$0xff]
    %v656 = vld [vmem:[#allocation8 + $0x348] sm:$0xff]
    %v657 = vld [vmem:[#allocation8 + $0x360] sm:$0xff]
    %v658 = vld [vmem:[#allocation8 + $0x368] sm:$0xff]
    %v659 = vld [vmem:[#allocation8 + $0x380] sm:$0xff]
    %v660 = vld [vmem:[#allocation8 + $0x388] sm:$0xff]
    %v661 = vld [vmem:[#allocation8 + $0x3a0] sm:$0xff]
    %v662 = vld [vmem:[#allocation8 + $0x3a8] sm:$0xff]
    %v663 = vld [vmem:[#allocation8 + $0x3c0] sm:$0xff]
    %v664 = vld [vmem:[#allocation8 + $0x3c8] sm:$0xff]
    %v665 = vld [vmem:[#allocation8 + $0x3e0] sm:$0xff]
    %v666 = vld [vmem:[#allocation8 + $0x3e8] sm:$0xff]
    %v667 = vlaneseq
    %v668 = vshrl.u32 %v667, 7
    %v669 = vsub.s32 2, %v668
    %v670 = vrot.slane %v96, %v669
    %v671 = vlaneseq
    %v672 = vshrl.u32 %v671, 7
    %v673 = vsub.s32 6, %v672
    %v674 = vrot.slane %v96, %v673
    %v677 = vlaneseq
    %v678 = vshrl.u32 %v677, 7
    %v679 = vsub.s32 2, %v678
    %v680 = vrot.slane %v670, %v679
    %v681 = vlaneseq
    %v682 = vshrl.u32 %v681, 7
    %v683 = vsub.s32 2, %v682
    %v684 = vrot.slane %v674, %v683
    %685 = vmatprep.subr.mxu0 %v634
    %686 = vmatpush1.msra.mxu0 %v633
    %687 = vmatprep.subr.mxu0 %v632
    %688 = vmatpush1.msra.mxu0 %v631
    %689 = vmatprep.subr.mxu0 %v630
    %690 = vmatpush1.msra.mxu0 %v629
    %691 = vmatprep.subr.mxu0 %v628
    %692 = vmatpush1.msra.mxu0 %v627
    %693 = vmatprep.subr.mxu0 %v626
    %694 = vmatpush1.msra.mxu0 %v625
    %695 = vmatprep.subr.mxu0 %v624
    %696 = vmatpush1.msra.mxu0 %v623
    %697 = vmatprep.subr.mxu0 %v622
    %698 = vmatpush1.msra.mxu0 %v621
    %699 = vmatprep.subr.mxu0 %v620
    %700 = vmatpush1.msra.mxu0 %v619
    %701 = vmatprep.subr.mxu0 %v618
    %702 = vmatpush1.msra.mxu0 %v617
    %703 = vmatprep.subr.mxu0 %v616
    %704 = vmatpush1.msra.mxu0 %v615
    %705 = vmatprep.subr.mxu0 %v614
    %706 = vmatpush1.msra.mxu0 %v613
    %707 = vmatprep.subr.mxu0 %v612
    %708 = vmatpush1.msra.mxu0 %v611
    %709 = vmatprep.subr.mxu0 %v610
    %710 = vmatpush1.msra.mxu0 %v609
    %711 = vmatprep.subr.mxu0 %v608
    %712 = vmatpush1.msra.mxu0 %v607
    %713 = vmatprep.subr.mxu0 %v606
    %714 = vmatpush1.msra.mxu0 %v605
    %715 = vmatprep.subr.mxu0 %v604
    %716 = vmatpush1.msra.mxu0 %v603
    %717 = vmatprep.subr.mxu0 %v666
    %718 = vmatpush2.msra.mxu0 %v665
    %719 = vmatprep.subr.mxu0 %v664
    %720 = vmatpush2.msra.mxu0 %v663
    %721 = vmatprep.subr.mxu0 %v662
    %722 = vmatpush2.msra.mxu0 %v661
    %723 = vmatprep.subr.mxu0 %v660
    %724 = vmatpush2.msra.mxu0 %v659
    %725 = vmatprep.subr.mxu0 %v658
    %726 = vmatpush2.msra.mxu0 %v657
    %727 = vmatprep.subr.mxu0 %v656
    %728 = vmatpush2.msra.mxu0 %v655
    %729 = vmatprep.subr.mxu0 %v654
    %730 = vmatpush2.msra.mxu0 %v653
    %731 = vmatprep.subr.mxu0 %v652
    %732 = vmatpush2.msra.mxu0 %v651
    %733 = vmatprep.subr.mxu0 %v650
    %734 = vmatpush2.msra.mxu0 %v649
    %735 = vmatprep.subr.mxu0 %v648
    %736 = vmatpush2.msra.mxu0 %v647
    %737 = vmatprep.subr.mxu0 %v646
    %738 = vmatpush2.msra.mxu0 %v645
    %739 = vmatprep.subr.mxu0 %v644
    %740 = vmatpush2.msra.mxu0 %v643
    %741 = vmatprep.subr.mxu0 %v642
    %742 = vmatpush2.msra.mxu0 %v641
    %743 = vmatprep.subr.mxu0 %v640
    %744 = vmatpush2.msra.mxu0 %v639
    %745 = vmatprep.subr.mxu0 %v638
    %746 = vmatpush2.msra.mxu0 %v637
    %747 = vmatprep.subr.mxu0 %v636
    %748 = vmatpush2.msra.mxu0 %v635
    %749 = vmatprep.mubr.f32.mxu0 %v600
    %750 = vmatmul.mubr.f32.gmra.mxu0 %v599
    %v751 = vpop.f32.mrf.mxu0
    %v752 = vadd.f32 %v680, %v751
    %v753 = vpop.f32.mrf.mxu0
    %v754 = vadd.f32 %v684, %v753
    %755 = vdwg.mxu0
    %v756 = vmax.f32 %v752, 0.0
    %v757 = vmax.f32 %v754, 0.0
    %v758 = vld [vmem:[#allocation8 + $0x10] sm:$0xff]
    %v759 = vld [vmem:[#allocation8 + $0x18] sm:$0xff]
    %v760 = vld [vmem:[#allocation8 + $0x30] sm:$0xff]
    %v761 = vld [vmem:[#allocation8 + $0x38] sm:$0xff]
    %v762 = vld [vmem:[#allocation8 + $0x50] sm:$0xff]
    %v763 = vld [vmem:[#allocation8 + $0x58] sm:$0xff]
    %v764 = vld [vmem:[#allocation8 + $0x70] sm:$0xff]
    %v765 = vld [vmem:[#allocation8 + $0x78] sm:$0xff]
    %v766 = vld [vmem:[#allocation8 + $0x90] sm:$0xff]
    %v767 = vld [vmem:[#allocation8 + $0x98] sm:$0xff]
    %v768 = vld [vmem:[#allocation8 + $0xb0] sm:$0xff]
    %v769 = vld [vmem:[#allocation8 + $0xb8] sm:$0xff]
    %v770 = vld [vmem:[#allocation8 + $0xd0] sm:$0xff]
    %v771 = vld [vmem:[#allocation8 + $0xd8] sm:$0xff]
    %v772 = vld [vmem:[#allocation8 + $0xf0] sm:$0xff]
    %v773 = vld [vmem:[#allocation8 + $0xf8] sm:$0xff]
    %v774 = vld [vmem:[#allocation8 + $0x110] sm:$0xff]
    %v775 = vld [vmem:[#allocation8 + $0x118] sm:$0xff]
    %v776 = vld [vmem:[#allocation8 + $0x130] sm:$0xff]
    %v777 = vld [vmem:[#allocation8 + $0x138] sm:$0xff]
    %v778 = vld [vmem:[#allocation8 + $0x150] sm:$0xff]
    %v779 = vld [vmem:[#allocation8 + $0x158] sm:$0xff]
    %v780 = vld [vmem:[#allocation8 + $0x170] sm:$0xff]
    %v781 = vld [vmem:[#allocation8 + $0x178] sm:$0xff]
    %v782 = vld [vmem:[#allocation8 + $0x190] sm:$0xff]
    %v783 = vld [vmem:[#allocation8 + $0x198] sm:$0xff]
    %v784 = vld [vmem:[#allocation8 + $0x1b0] sm:$0xff]
    %v785 = vld [vmem:[#allocation8 + $0x1b8] sm:$0xff]
    %v786 = vld [vmem:[#allocation8 + $0x1d0] sm:$0xff]
    %v787 = vld [vmem:[#allocation8 + $0x1d8] sm:$0xff]
    %v788 = vld [vmem:[#allocation8 + $0x1f0] sm:$0xff]
    %v789 = vld [vmem:[#allocation8 + $0x1f8] sm:$0xff]
    %v790 = vld [vmem:[#allocation8 + $0x210] sm:$0xff]
    %v791 = vld [vmem:[#allocation8 + $0x218] sm:$0xff]
    %v792 = vld [vmem:[#allocation8 + $0x230] sm:$0xff]
    %v793 = vld [vmem:[#allocation8 + $0x238] sm:$0xff]
    %v794 = vld [vmem:[#allocation8 + $0x250] sm:$0xff]
    %v795 = vld [vmem:[#allocation8 + $0x258] sm:$0xff]
    %v796 = vld [vmem:[#allocation8 + $0x270] sm:$0xff]
    %v797 = vld [vmem:[#allocation8 + $0x278] sm:$0xff]
    %v798 = vld [vmem:[#allocation8 + $0x290] sm:$0xff]
    %v799 = vld [vmem:[#allocation8 + $0x298] sm:$0xff]
    %v800 = vld [vmem:[#allocation8 + $0x2b0] sm:$0xff]
    %v801 = vld [vmem:[#allocation8 + $0x2b8] sm:$0xff]
    %v802 = vld [vmem:[#allocation8 + $0x2d0] sm:$0xff]
    %v803 = vld [vmem:[#allocation8 + $0x2d8] sm:$0xff]
    %v804 = vld [vmem:[#allocation8 + $0x2f0] sm:$0xff]
    %v805 = vld [vmem:[#allocation8 + $0x2f8] sm:$0xff]
    %v806 = vld [vmem:[#allocation8 + $0x310] sm:$0xff]
    %v807 = vld [vmem:[#allocation8 + $0x318] sm:$0xff]
    %v808 = vld [vmem:[#allocation8 + $0x330] sm:$0xff]
    %v809 = vld [vmem:[#allocation8 + $0x338] sm:$0xff]
    %v810 = vld [vmem:[#allocation8 + $0x350] sm:$0xff]
    %v811 = vld [vmem:[#allocation8 + $0x358] sm:$0xff]
    %v812 = vld [vmem:[#allocation8 + $0x370] sm:$0xff]
    %v813 = vld [vmem:[#allocation8 + $0x378] sm:$0xff]
    %v814 = vld [vmem:[#allocation8 + $0x390] sm:$0xff]
    %v815 = vld [vmem:[#allocation8 + $0x398] sm:$0xff]
    %v816 = vld [vmem:[#allocation8 + $0x3b0] sm:$0xff]
    %v817 = vld [vmem:[#allocation8 + $0x3b8] sm:$0xff]
    %v818 = vld [vmem:[#allocation8 + $0x3d0] sm:$0xff]
    %v819 = vld [vmem:[#allocation8 + $0x3d8] sm:$0xff]
    %v820 = vld [vmem:[#allocation8 + $0x3f0] sm:$0xff]
    %v821 = vld [vmem:[#allocation8 + $0x3f8] sm:$0xff]
    %v822 = vlaneseq
    %v823 = vshrl.u32 %v822, 7
    %v824 = vsub.s32 2, %v823
    %v825 = vrot.slane %v97, %v824
    %v826 = vlaneseq
    %v827 = vshrl.u32 %v826, 7
    %v828 = vsub.s32 6, %v827
    %v829 = vrot.slane %v97, %v828
    %v832 = vlaneseq
    %v833 = vshrl.u32 %v832, 7
    %v834 = vsub.s32 2, %v833
    %v835 = vrot.slane %v825, %v834
    %v836 = vlaneseq
    %v837 = vshrl.u32 %v836, 7
    %v838 = vsub.s32 2, %v837
    %v839 = vrot.slane %v829, %v838
    %840 = vmatprep.subr.mxu0 %v789
    %841 = vmatpush1.msra.mxu0 %v788
    %842 = vmatprep.subr.mxu0 %v787
    %843 = vmatpush1.msra.mxu0 %v786
    %844 = vmatprep.subr.mxu0 %v785
    %845 = vmatpush1.msra.mxu0 %v784
    %846 = vmatprep.subr.mxu0 %v783
    %847 = vmatpush1.msra.mxu0 %v782
    %848 = vmatprep.subr.mxu0 %v781
    %849 = vmatpush1.msra.mxu0 %v780
    %850 = vmatprep.subr.mxu0 %v779
    %851 = vmatpush1.msra.mxu0 %v778
    %852 = vmatprep.subr.mxu0 %v777
    %853 = vmatpush1.msra.mxu0 %v776
    %854 = vmatprep.subr.mxu0 %v775
    %855 = vmatpush1.msra.mxu0 %v774
    %856 = vmatprep.subr.mxu0 %v773
    %857 = vmatpush1.msra.mxu0 %v772
    %858 = vmatprep.subr.mxu0 %v771
    %859 = vmatpush1.msra.mxu0 %v770
    %860 = vmatprep.subr.mxu0 %v769
    %861 = vmatpush1.msra.mxu0 %v768
    %862 = vmatprep.subr.mxu0 %v767
    %863 = vmatpush1.msra.mxu0 %v766
    %864 = vmatprep.subr.mxu0 %v765
    %865 = vmatpush1.msra.mxu0 %v764
    %866 = vmatprep.subr.mxu0 %v763
    %867 = vmatpush1.msra.mxu0 %v762
    %868 = vmatprep.subr.mxu0 %v761
    %869 = vmatpush1.msra.mxu0 %v760
    %870 = vmatprep.subr.mxu0 %v759
    %871 = vmatpush1.msra.mxu0 %v758
    %872 = vmatprep.subr.mxu0 %v821
    %873 = vmatpush2.msra.mxu0 %v820
    %874 = vmatprep.subr.mxu0 %v819
    %875 = vmatpush2.msra.mxu0 %v818
    %876 = vmatprep.subr.mxu0 %v817
    %877 = vmatpush2.msra.mxu0 %v816
    %878 = vmatprep.subr.mxu0 %v815
    %879 = vmatpush2.msra.mxu0 %v814
    %880 = vmatprep.subr.mxu0 %v813
    %881 = vmatpush2.msra.mxu0 %v812
    %882 = vmatprep.subr.mxu0 %v811
    %883 = vmatpush2.msra.mxu0 %v810
    %884 = vmatprep.subr.mxu0 %v809
    %885 = vmatpush2.msra.mxu0 %v808
    %886 = vmatprep.subr.mxu0 %v807
    %887 = vmatpush2.msra.mxu0 %v806
    %888 = vmatprep.subr.mxu0 %v805
    %889 = vmatpush2.msra.mxu0 %v804
    %890 = vmatprep.subr.mxu0 %v803
    %891 = vmatpush2.msra.mxu0 %v802
    %892 = vmatprep.subr.mxu0 %v801
    %893 = vmatpush2.msra.mxu0 %v800
    %894 = vmatprep.subr.mxu0 %v799
    %895 = vmatpush2.msra.mxu0 %v798
    %896 = vmatprep.subr.mxu0 %v797
    %897 = vmatpush2.msra.mxu0 %v796
    %898 = vmatprep.subr.mxu0 %v795
    %899 = vmatpush2.msra.mxu0 %v794
    %900 = vmatprep.subr.mxu0 %v793
    %901 = vmatpush2.msra.mxu0 %v792
    %902 = vmatprep.subr.mxu0 %v791
    %903 = vmatpush2.msra.mxu0 %v790
    %904 = vmatprep.mubr.f32.mxu0 %v602
    %905 = vmatmul.mubr.f32.gmra.mxu0 %v601
    %v906 = vpop.f32.mrf.mxu0
    %v907 = vadd.f32 %v835, %v906
    %v908 = vpop.f32.mrf.mxu0
    %v909 = vadd.f32 %v839, %v908
    %910 = vdwg.mxu0
    %v911 = vmax.f32 %v907, 0.0
    %v912 = vmax.f32 %v909, 0.0
    %v913 = vld [vmem:[#allocation10] sm:$0xff]
    %v914 = vld [vmem:[#allocation10 + $0x8] sm:$0xff]
    %v915 = vld [vmem:[#allocation10 + $0x10] sm:$0xff]
    %v916 = vld [vmem:[#allocation10 + $0x18] sm:$0xff]
    %v917 = vld [vmem:[#allocation10 + $0x20] sm:$0xff]
    %v918 = vld [vmem:[#allocation10 + $0x28] sm:$0xff]
    %v919 = vld [vmem:[#allocation10 + $0x30] sm:$0xff]
    %v920 = vld [vmem:[#allocation10 + $0x38] sm:$0xff]
    %v921 = vld [vmem:[#allocation10 + $0x40] sm:$0xff]
    %v922 = vld [vmem:[#allocation10 + $0x48] sm:$0xff]
    %v923 = vld [vmem:[#allocation10 + $0x50] sm:$0xff]
    %v924 = vld [vmem:[#allocation10 + $0x58] sm:$0xff]
    %v925 = vld [vmem:[#allocation10 + $0x60] sm:$0xff]
    %v926 = vld [vmem:[#allocation10 + $0x68] sm:$0xff]
    %v927 = vld [vmem:[#allocation10 + $0x70] sm:$0xff]
    %v928 = vld [vmem:[#allocation10 + $0x78] sm:$0xff]
    %v929 = vld [vmem:[#allocation10 + $0x80] sm:$0xff]
    %v930 = vld [vmem:[#allocation10 + $0x88] sm:$0xff]
    %v931 = vld [vmem:[#allocation10 + $0x90] sm:$0xff]
    %v932 = vld [vmem:[#allocation10 + $0x98] sm:$0xff]
    %v933 = vld [vmem:[#allocation10 + $0xa0] sm:$0xff]
    %v934 = vld [vmem:[#allocation10 + $0xa8] sm:$0xff]
    %v935 = vld [vmem:[#allocation10 + $0xb0] sm:$0xff]
    %v936 = vld [vmem:[#allocation10 + $0xb8] sm:$0xff]
    %v937 = vld [vmem:[#allocation10 + $0xc0] sm:$0xff]
    %v938 = vld [vmem:[#allocation10 + $0xc8] sm:$0xff]
    %v939 = vld [vmem:[#allocation10 + $0xd0] sm:$0xff]
    %v940 = vld [vmem:[#allocation10 + $0xd8] sm:$0xff]
    %v941 = vld [vmem:[#allocation10 + $0xe0] sm:$0xff]
    %v942 = vld [vmem:[#allocation10 + $0xe8] sm:$0xff]
    %v943 = vld [vmem:[#allocation10 + $0xf0] sm:$0xff]
    %v944 = vld [vmem:[#allocation10 + $0xf8] sm:$0xff]
    %v945 = vld [vmem:[#allocation10 + $0x100] sm:$0xff]
    %v946 = vld [vmem:[#allocation10 + $0x108] sm:$0xff]
    %v947 = vld [vmem:[#allocation10 + $0x110] sm:$0xff]
    %v948 = vld [vmem:[#allocation10 + $0x118] sm:$0xff]
    %v949 = vld [vmem:[#allocation10 + $0x120] sm:$0xff]
    %v950 = vld [vmem:[#allocation10 + $0x128] sm:$0xff]
    %v951 = vld [vmem:[#allocation10 + $0x130] sm:$0xff]
    %v952 = vld [vmem:[#allocation10 + $0x138] sm:$0xff]
    %v953 = vld [vmem:[#allocation10 + $0x140] sm:$0xff]
    %v954 = vld [vmem:[#allocation10 + $0x148] sm:$0xff]
    %v955 = vld [vmem:[#allocation10 + $0x150] sm:$0xff]
    %v956 = vld [vmem:[#allocation10 + $0x158] sm:$0xff]
    %v957 = vld [vmem:[#allocation10 + $0x160] sm:$0xff]
    %v958 = vld [vmem:[#allocation10 + $0x168] sm:$0xff]
    %v959 = vld [vmem:[#allocation10 + $0x170] sm:$0xff]
    %v960 = vld [vmem:[#allocation10 + $0x178] sm:$0xff]
    %v961 = vld [vmem:[#allocation10 + $0x180] sm:$0xff]
    %v962 = vld [vmem:[#allocation10 + $0x188] sm:$0xff]
    %v963 = vld [vmem:[#allocation10 + $0x190] sm:$0xff]
    %v964 = vld [vmem:[#allocation10 + $0x198] sm:$0xff]
    %v965 = vld [vmem:[#allocation10 + $0x1a0] sm:$0xff]
    %v966 = vld [vmem:[#allocation10 + $0x1a8] sm:$0xff]
    %v967 = vld [vmem:[#allocation10 + $0x1b0] sm:$0xff]
    %v968 = vld [vmem:[#allocation10 + $0x1b8] sm:$0xff]
    %v969 = vld [vmem:[#allocation10 + $0x1c0] sm:$0xff]
    %v970 = vld [vmem:[#allocation10 + $0x1c8] sm:$0xff]
    %v971 = vld [vmem:[#allocation10 + $0x1d0] sm:$0xff]
    %v972 = vld [vmem:[#allocation10 + $0x1d8] sm:$0xff]
    %v973 = vld [vmem:[#allocation10 + $0x1e0] sm:$0xff]
    %v974 = vld [vmem:[#allocation10 + $0x1e8] sm:$0xff]
    %v975 = vld [vmem:[#allocation10 + $0x1f0] sm:$0xff]
    %v976 = vld [vmem:[#allocation10 + $0x1f8] sm:$0xff]
    %977 = vmatprep.subr.mxu0 0.0
    %978 = vmatpush1.msra.mxu0 %v960
    %979 = vmatprep.subr.mxu0 0.0
    %980 = vmatpush1.msra.mxu0 %v959
    %981 = vmatprep.subr.mxu0 0.0
    %982 = vmatpush1.msra.mxu0 %v958
    %983 = vmatprep.subr.mxu0 0.0
    %984 = vmatpush1.msra.mxu0 %v957
    %985 = vmatprep.subr.mxu0 0.0
    %986 = vmatpush1.msra.mxu0 %v956
    %987 = vmatprep.subr.mxu0 0.0
    %988 = vmatpush1.msra.mxu0 %v955
    %989 = vmatprep.subr.mxu0 0.0
    %990 = vmatpush1.msra.mxu0 %v954
    %991 = vmatprep.subr.mxu0 0.0
    %992 = vmatpush1.msra.mxu0 %v953
    %993 = vmatprep.subr.mxu0 0.0
    %994 = vmatpush1.msra.mxu0 %v952
    %995 = vmatprep.subr.mxu0 0.0
    %996 = vmatpush1.msra.mxu0 %v951
    %997 = vmatprep.subr.mxu0 0.0
    %998 = vmatpush1.msra.mxu0 %v950
    %999 = vmatprep.subr.mxu0 0.0
    %1000 = vmatpush1.msra.mxu0 %v949
    %1001 = vmatprep.subr.mxu0 0.0
    %1002 = vmatpush1.msra.mxu0 %v948
    %1003 = vmatprep.subr.mxu0 0.0
    %1004 = vmatpush1.msra.mxu0 %v947
    %1005 = vmatprep.subr.mxu0 0.0
    %1006 = vmatpush1.msra.mxu0 %v946
    %1007 = vmatprep.subr.mxu0 0.0
    %1008 = vmatpush1.msra.mxu0 %v945
    %1009 = vmatprep.subr.mxu0 0.0
    %1010 = vmatpush2.msra.mxu0 %v976
    %1011 = vmatprep.subr.mxu0 0.0
    %1012 = vmatpush2.msra.mxu0 %v975
    %1013 = vmatprep.subr.mxu0 0.0
    %1014 = vmatpush2.msra.mxu0 %v974
    %1015 = vmatprep.subr.mxu0 0.0
    %1016 = vmatpush2.msra.mxu0 %v973
    %1017 = vmatprep.subr.mxu0 0.0
    %1018 = vmatpush2.msra.mxu0 %v972
    %1019 = vmatprep.subr.mxu0 0.0
    %1020 = vmatpush2.msra.mxu0 %v971
    %1021 = vmatprep.subr.mxu0 0.0
    %1022 = vmatpush2.msra.mxu0 %v970
    %1023 = vmatprep.subr.mxu0 0.0
    %1024 = vmatpush2.msra.mxu0 %v969
    %1025 = vmatprep.subr.mxu0 0.0
    %1026 = vmatpush2.msra.mxu0 %v968
    %1027 = vmatprep.subr.mxu0 0.0
    %1028 = vmatpush2.msra.mxu0 %v967
    %1029 = vmatprep.subr.mxu0 0.0
    %1030 = vmatpush2.msra.mxu0 %v966
    %1031 = vmatprep.subr.mxu0 0.0
    %1032 = vmatpush2.msra.mxu0 %v965
    %1033 = vmatprep.subr.mxu0 0.0
    %1034 = vmatpush2.msra.mxu0 %v964
    %1035 = vmatprep.subr.mxu0 0.0
    %1036 = vmatpush2.msra.mxu0 %v963
    %1037 = vmatprep.subr.mxu0 0.0
    %1038 = vmatpush2.msra.mxu0 %v962
    %1039 = vmatprep.subr.mxu0 0.0
    %1040 = vmatpush2.msra.mxu0 %v961
    %1041 = vmatprep.mubr.f32.mxu0 %v912
    %1042 = vmatmul.mubr.f32.gmra.mxu0 %v911
    %v1043 = vpop.f32.mrf.mxu0
    %v1044 = vadd.f32 0.0, %v1043
    %v1045 = vpop.f32.mrf.mxu0
    %1046 = vdwg.mxu0
    %1047 = vmatprep.subr.mxu0 0.0
    %1048 = vmatpush1.msra.mxu0 %v928
    %1049 = vmatprep.subr.mxu0 0.0
    %1050 = vmatpush1.msra.mxu0 %v927
    %1051 = vmatprep.subr.mxu0 0.0
    %1052 = vmatpush1.msra.mxu0 %v926
    %1053 = vmatprep.subr.mxu0 0.0
    %1054 = vmatpush1.msra.mxu0 %v925
    %1055 = vmatprep.subr.mxu0 0.0
    %1056 = vmatpush1.msra.mxu0 %v924
    %1057 = vmatprep.subr.mxu0 0.0
    %1058 = vmatpush1.msra.mxu0 %v923
    %1059 = vmatprep.subr.mxu0 0.0
    %1060 = vmatpush1.msra.mxu0 %v922
    %1061 = vmatprep.subr.mxu0 0.0
    %1062 = vmatpush1.msra.mxu0 %v921
    %1063 = vmatprep.subr.mxu0 0.0
    %1064 = vmatpush1.msra.mxu0 %v920
    %1065 = vmatprep.subr.mxu0 0.0
    %1066 = vmatpush1.msra.mxu0 %v919
    %1067 = vmatprep.subr.mxu0 0.0
    %1068 = vmatpush1.msra.mxu0 %v918
    %1069 = vmatprep.subr.mxu0 0.0
    %1070 = vmatpush1.msra.mxu0 %v917
    %1071 = vmatprep.subr.mxu0 0.0
    %1072 = vmatpush1.msra.mxu0 %v916
    %1073 = vmatprep.subr.mxu0 0.0
    %1074 = vmatpush1.msra.mxu0 %v915
    %1075 = vmatprep.subr.mxu0 0.0
    %1076 = vmatpush1.msra.mxu0 %v914
    %1077 = vmatprep.subr.mxu0 0.0
    %1078 = vmatpush1.msra.mxu0 %v913
    %1079 = vmatprep.subr.mxu0 0.0
    %1080 = vmatpush2.msra.mxu0 %v944
    %1081 = vmatprep.subr.mxu0 0.0
    %1082 = vmatpush2.msra.mxu0 %v943
    %1083 = vmatprep.subr.mxu0 0.0
    %1084 = vmatpush2.msra.mxu0 %v942
    %1085 = vmatprep.subr.mxu0 0.0
    %1086 = vmatpush2.msra.mxu0 %v941
    %1087 = vmatprep.subr.mxu0 0.0
    %1088 = vmatpush2.msra.mxu0 %v940
    %1089 = vmatprep.subr.mxu0 0.0
    %1090 = vmatpush2.msra.mxu0 %v939
    %1091 = vmatprep.subr.mxu0 0.0
    %1092 = vmatpush2.msra.mxu0 %v938
    %1093 = vmatprep.subr.mxu0 0.0
    %1094 = vmatpush2.msra.mxu0 %v937
    %1095 = vmatprep.subr.mxu0 0.0
    %1096 = vmatpush2.msra.mxu0 %v936
    %1097 = vmatprep.subr.mxu0 0.0
    %1098 = vmatpush2.msra.mxu0 %v935
    %1099 = vmatprep.subr.mxu0 0.0
    %1100 = vmatpush2.msra.mxu0 %v934
    %1101 = vmatprep.subr.mxu0 0.0
    %1102 = vmatpush2.msra.mxu0 %v933
    %1103 = vmatprep.subr.mxu0 0.0
    %1104 = vmatpush2.msra.mxu0 %v932
    %1105 = vmatprep.subr.mxu0 0.0
    %1106 = vmatpush2.msra.mxu0 %v931
    %1107 = vmatprep.subr.mxu0 0.0
    %1108 = vmatpush2.msra.mxu0 %v930
    %1109 = vmatprep.subr.mxu0 0.0
    %1110 = vmatpush2.msra.mxu0 %v929
    %1111 = vmatprep.mubr.f32.mxu0 %v757
    %1112 = vmatmul.mubr.f32.gmra.mxu0 %v756
    %v1113 = vpop.f32.mrf.mxu0
    %v1114 = vadd.f32 %v1044, %v1113
    %v1115 = vpop.f32.mrf.mxu0
    %1116 = vdwg.mxu0
    %v1117 = vlaneseq
    %v1118 = vshrl.u32 %v1117, 7
    %v1119 = vsub.s32 3, %v1118
    %v1120 = vrot.slane %v96, %v1119
    %v1121 = vadd.f32 %v1114, %v1120
    %1122 = vst [vmem:[#allocation11] sm:$0xff] %v1121
    // Predicated region
    $region54: #{tpu_custom_call.1} parent=1 // pred_check
      _
    $region55: #{tpu_custom_call.1} parent=1 // pred_check_branch
      %1124 = sbr.rel (0) target = $region57
    $region56: #{tpu_custom_call.1} parent=1 // pred_region
      %s1126 = ssub.s32 128, 128
      %1127 = vsyncadd [#allocation4], %s1126
      %s1129 = sshll.u32 [#allocation11], 4
      %s1130 = int_to_ptr.vmem [resolvable:$true] %s1129
      %1132 = dma.vmem_to_hbm [thread:$0]  %s1130, 128, %s8, [#allocation4]
    $region57: #{tpu_custom_call.1} parent=1 // pred_fallthru
      _
    // Predicated region
    $region58: #{tpu_custom_call.1} parent=1 // pred_check
      _
    $region59: #{tpu_custom_call.1} parent=1 // pred_check_branch
      %1134 = sbr.rel (0) target = $region61
    $region60: #{tpu_custom_call.1} parent=1 // pred_region
      %1135 = dma.done [#allocation4], 128
    $region61: #{tpu_custom_call.1} parent=1 // pred_fallthru
      _
    %1136 = vsyncpa [#allocation3], 1
    %1137 = vsyncpa [#allocation6], 1
    %1138 = vsyncpa [#allocation9], 1
    %1139 = vsyncpa [#allocation4], 1

</llo_original>
